<compile_context>
chip_gen: v6e
topology: v6e:2x2x1
jax: 0.10.0
libtpu: 0.0.40
codegen_flags: <defaults>
</compile_context>

<pallas_src>
import functools

import jax
import jax.numpy as jnp
from jax.experimental import pallas as pl
from jax.experimental.pallas import tpu as pltpu


def _round_up(x, m):
    return ((x + m - 1) // m) * m


def _pick_tile(ext, cap):
    """Largest multiple of 128 that divides `ext` (itself a 128-multiple) and is <= cap."""
    units = ext // 128
    best = 1
    for d in range(1, max(1, cap // 128) + 1):
        if units % d == 0:
            best = d
    return best * 128


# ----------------------------------------------------------------------------
# Kernel 1:  H = act(features @ W)        (computed exactly once per element)
# grid = (row blocks of n_pad, lane blocks of fo_pad, reduction blocks of fi_pad)
# ----------------------------------------------------------------------------
def _hidden_kernel(feat_ref, w_ref, h_ref, acc_ref, *, apply_tanh):
    k = pl.program_id(2)

    @pl.when(k == 0)
    def _():
        acc_ref[...] = jnp.zeros_like(acc_ref)

    acc_ref[...] += jnp.dot(feat_ref[...], w_ref[...],
                            preferred_element_type=jnp.float32)

    @pl.when(k == pl.num_programs(2) - 1)
    def _():
        h = acc_ref[...]
        if apply_tanh:
            h = jnp.tanh(h)        # EUP slot, once per element total
        h_ref[...] = h.astype(h_ref.dtype)


# ----------------------------------------------------------------------------
# Kernel 2:  out = adj @ H
# grid = (row blocks of N, lane blocks of fo_pad, node-reduction blocks of n_pad)
# adj is streamed unpadded; the ragged last reduction block is masked in-kernel.
# Accumulates directly into the resident f32 out_ref (no scratch).
# ----------------------------------------------------------------------------
def _aggregate_kernel(adj_ref, h_ref, out_ref, *, n_valid, tkn, ragged):
    k = pl.program_id(2)

    @pl.when(k == 0)
    def _():
        out_ref[...] = jnp.zeros_like(out_ref)

    adj_tile = adj_ref[...]
    if ragged:
        # Zero the column overhang of the last reduction block (the matching H
        # rows are exact zeros by construction, so 0 * 0 contributes nothing,
        # and no HBM pad of the N x N adjacency is ever materialized).
        col = jax.lax.broadcasted_iota(jnp.int32, adj_tile.shape, 1) + k * tkn
        adj_tile = jnp.where(col < n_valid, adj_tile, jnp.zeros_like(adj_tile))

    out_ref[...] += jnp.dot(adj_tile, h_ref[...],
                            preferred_element_type=jnp.float32)


def gnn_layer_forward(
    features,
    adj,
    weight,
    active=False,
    *,
    compute_dtype=jnp.bfloat16,   # matmul operand dtype (f32 accumulation always)
    vmem_limit_bytes=32 * 1024 * 1024,   # <= half of v7x's 64 MiB/TC
):
    """GCN branch of GNNLayer.forward:  out = adj @ act(features @ W).

    features: [N, in_features] float
    adj:      [N, N]           float (dense representation of the sparse adj)
    weight:   [in_features, out_features] float
    returns:  [N, out_features] float32
    """
    N, f_in = features.shape
    f_in_w, f_out = weight.shape
    assert f_in == f_in_w, "features/weight inner dims mismatch"
    assert adj.shape == (N, N), "adj must be [N, N]"

    # Padded, lane-dense extents (multiples of 128).
    n_pad = _round_up(N, 128)
    fi_pad = _round_up(f_in, 128)
    fo_pad = _round_up(f_out, 128)

    # Tile selection: largest 128-multiple divisor under a cap.  tfo == fo_pad
    # whenever fo_pad <= 512 -> the N^2 adjacency is streamed exactly once.
    tm1 = _pick_tile(n_pad, 512)     # H row tile
    tki = _pick_tile(fi_pad, 512)    # in_features reduction tile
    tfo = _pick_tile(fo_pad, 512)    # out_features lane tile (shared by both kernels)
    tm2 = min(256, n_pad)            # output row tile (ragged rows handled in-kernel)
    tkn = _pick_tile(n_pad, 1024)    # node reduction tile (divides n_pad -> H blocks dense)

    # Cast the (small) dense operands; adj is cast only if needed -- callers of
    # a multi-layer model should supply it already in compute_dtype.
    feat_c = features.astype(compute_dtype)
    w_c = weight.astype(compute_dtype)
    adj_c = adj if adj.dtype == compute_dtype else adj.astype(compute_dtype)

    # Zero-pad ONLY features/weight (cheap: O(N*f_in), not O(N^2)).
    feat_p = jnp.pad(feat_c, ((0, n_pad - N), (0, fi_pad - f_in)))
    w_p = jnp.pad(w_c, ((0, fi_pad - f_in), (0, fo_pad - f_out)))

    # ---- Kernel 1: H = act(feat @ W), emitted in compute_dtype -------------
    h = pl.pallas_call(
        functools.partial(_hidden_kernel, apply_tanh=bool(active)),
        out_shape=jax.ShapeDtypeStruct((n_pad, fo_pad), compute_dtype),
        grid_spec=pltpu.PrefetchScalarGridSpec(
            num_scalar_prefetch=0,
            grid=(n_pad // tm1, fo_pad // tfo, fi_pad // tki),
            in_specs=[
                pl.BlockSpec((tm1, tki), lambda i, j, k: (i, k)),   # features
                pl.BlockSpec((tki, tfo), lambda i, j, k: (k, j)),   # weight
            ],
            out_specs=pl.BlockSpec((tm1, tfo), lambda i, j, k: (i, j)),
            scratch_shapes=[pltpu.VMEM((tm1, tfo), jnp.float32)],
        ),
        compiler_params=pltpu.CompilerParams(
            dimension_semantics=("parallel", "parallel", "arbitrary"),
            vmem_limit_bytes=vmem_limit_bytes,
        ),
    )(feat_p, w_p)

    # ---- Kernel 2: out = adj @ H  (adj unpadded, streamed once if tfo==fo_pad)
    ragged = (n_pad != N)
    out_p = pl.pallas_call(
        functools.partial(_aggregate_kernel, n_valid=N, tkn=tkn, ragged=ragged),
        out_shape=jax.ShapeDtypeStruct((N, fo_pad), jnp.float32),
        grid_spec=pltpu.PrefetchScalarGridSpec(
            num_scalar_prefetch=0,
            grid=(pl.cdiv(N, tm2), fo_pad // tfo, n_pad // tkn),
            in_specs=[
                pl.BlockSpec((tm2, tkn), lambda i, j, k: (i, k)),   # adj
                pl.BlockSpec((tkn, tfo), lambda i, j, k: (k, j)),   # H
            ],
            out_specs=pl.BlockSpec((tm2, tfo), lambda i, j, k: (i, j)),
        ),
        compiler_params=pltpu.CompilerParams(
            dimension_semantics=("parallel", "parallel", "arbitrary"),
            vmem_limit_bytes=vmem_limit_bytes,
        ),
    )(adj_c, h)

    return out_p[:, :f_out]


# ----------------------------------------------------------------------------
# Demo / self-test
# ----------------------------------------------------------------------------
def xavier_uniform(key, shape, dtype=jnp.float32):
    """Matches torch.nn.init.xavier_uniform_ (gain=1)."""
    fan_in, fan_out = shape
    limit = (6.0 / (fan_in + fan_out)) ** 0.5
    return jax.random.uniform(key, shape, dtype, minval=-limit, maxval=limit)


def _make_inputs(key, n, f_in, f_out):
    k_feat, k_adj, k_w = jax.random.split(key, 3)
    features = jax.random.normal(k_feat, (n, f_in), dtype=jnp.float32)
    adj_raw = (jax.random.uniform(k_adj, (n, n)) > 0.5).astype(jnp.float32)
    adj_raw = adj_raw + adj_raw.T + jnp.eye(n, dtype=jnp.float32)
    adj = adj_raw / jnp.sum(adj_raw, axis=1, keepdims=True)
    weight = xavier_uniform(k_w, (f_in, f_out))
    return features, adj, weight


if __name__ == "__main__":
    key = jax.random.PRNGKey(0)
    k_small, k_big = jax.random.split(key, 2)

    # 1) Small shapes consistent with the module (single-block path).
    features, adj, weight = _make_inputs(k_small, n=8, f_in=32, f_out=16)
    ref_plain = adj @ (features @ weight)
    ref_active = adj @ jnp.tanh(features @ weight)

    # Exact-semantics path (compute_dtype=float32): tight check.
    out_f32 = gnn_layer_forward(features, adj, weight, active=True,
                                compute_dtype=jnp.float32)
    jax.block_until_ready(out_f32)
    assert jnp.allclose(out_f32, ref_active, atol=1e-5, rtol=1e-5)

    # Default bf16 path (operands bf16, accumulation f32): mixed-precision check.
    adj_bf16 = adj.astype(jnp.bfloat16)   # cast adj ONCE; reused across layer calls
    out_plain = gnn_layer_forward(features, adj_bf16, weight, active=False)
    out_active = gnn_layer_forward(features, adj_bf16, weight, active=True)
    jax.block_until_ready((out_plain, out_active))
    assert jnp.allclose(out_plain, ref_plain, atol=5e-2, rtol=5e-2)
    assert jnp.allclose(out_active, ref_active, atol=5e-2, rtol=5e-2)

    # 2) Ragged shapes: pad-free adj path, in-kernel edge masking, multi-block grid.
    features2, adj2, weight2 = _make_inputs(k_big, n=300, f_in=96, f_out=40)
    ref2 = adj2 @ jnp.tanh(features2 @ weight2)

    # Tight structural check of the ragged/masked path at f32.
    out2_f32 = gnn_layer_forward(features2, adj2, weight2, active=True,
                                 compute_dtype=jnp.float32)
    jax.block_until_ready(out2_f32)
    assert jnp.allclose(out2_f32, ref2, atol=1e-4, rtol=1e-4)

    # Default bf16 path on the same ragged shapes.
    adj2_bf16 = adj2.astype(jnp.bfloat16)
    out2 = gnn_layer_forward(features2, adj2_bf16, weight2, active=True)
    jax.block_until_ready(out2)
    assert jnp.allclose(out2, ref2, atol=5e-2, rtol=5e-2)

    print("KERNEL_OK")
</pallas_src>

<mosaic_0001>
module attributes {stable_mosaic.version = 11 : i64} {
  func.func @_hidden_kernel(%arg0: i32, %arg1: i32, %arg2: i32, %arg3: memref<128x128xf32, #tpu.memory_space<vmem>>, %arg4: memref<128x128xf32, #tpu.memory_space<vmem>>, %arg5: memref<128x128xf32, #tpu.memory_space<vmem>>, %arg6: memref<128x128xf32, #tpu.memory_space<vmem>>) attributes {dimension_semantics = [#tpu.dimension_semantics<parallel>, #tpu.dimension_semantics<parallel>, #tpu.dimension_semantics<arbitrary>], iteration_bounds = array<i64: 1, 1, 1>, scalar_prefetch = 0 : i64, scratch_operands = 1 : i64, tpu.core_type = #tpu.core_type<tc>, window_params = [{transform_indices = @transform_0, window_bounds = array<i64: 128, 128>}, {transform_indices = @transform_1, window_bounds = array<i64: 128, 128>}, {transform_indices = @transform_2, window_bounds = array<i64: 128, 128>}]} {
    %c0_i32 = arith.constant 0 : i32
    %0 = arith.cmpi eq, %arg2, %c0_i32 : i32
    %1 = arith.extui %0 : i1 to i32
    %c0_i32_0 = arith.constant 0 : i32
    %2 = arith.cmpi ne, %1, %c0_i32_0 : i32
    scf.if %2 {
      %cst_10 = arith.constant 0.000000e+00 : f32
      %12 = vector.broadcast %cst_10 : f32 to vector<128x128xf32>
      %c0_11 = arith.constant 0 : index
      %c0_12 = arith.constant 0 : index
      %13 = vector.load %arg6[%c0_11, %c0_12] : memref<128x128xf32, #tpu.memory_space<vmem>>, vector<128x128xf32>
      tpu.vector_store %arg6[%c0_11, %c0_12], %12 {strides = array<i32>} : memref<128x128xf32, #tpu.memory_space<vmem>>, vector<128x128xf32>,
    } else {
    }
    %c0 = arith.constant 0 : index
    %c0_1 = arith.constant 0 : index
    %3 = vector.load %arg6[%c0, %c0_1] : memref<128x128xf32, #tpu.memory_space<vmem>>, vector<128x128xf32>
    %c0_2 = arith.constant 0 : index
    %c0_3 = arith.constant 0 : index
    %4 = vector.load %arg3[%c0_2, %c0_3] : memref<128x128xf32, #tpu.memory_space<vmem>>, vector<128x128xf32>
    %c0_4 = arith.constant 0 : index
    %c0_5 = arith.constant 0 : index
    %5 = vector.load %arg4[%c0_4, %c0_5] : memref<128x128xf32, #tpu.memory_space<vmem>>, vector<128x128xf32>
    %cst = arith.constant dense<0.000000e+00> : vector<128x128xf32>
    %6 = tpu.matmul %4, %5, %cst {dimension_numbers = #tpu.dot_dimension_numbers<[1], [0], [0], [1], [0, 0, 1, 1], [], []>} : vector<128x128xf32>, vector<128x128xf32>, vector<128x128xf32> -> vector<128x128xf32>
    %7 = arith.addf %3, %6 : vector<128x128xf32>
    %c0_6 = arith.constant 0 : index
    %c0_7 = arith.constant 0 : index
    %8 = vector.load %arg6[%c0_6, %c0_7] : memref<128x128xf32, #tpu.memory_space<vmem>>, vector<128x128xf32>
    tpu.vector_store %arg6[%c0_6, %c0_7], %7 {strides = array<i32>} : memref<128x128xf32, #tpu.memory_space<vmem>>, vector<128x128xf32>,
    %c0_i32_8 = arith.constant 0 : i32
    %9 = arith.cmpi eq, %arg2, %c0_i32_8 : i32
    %10 = arith.extui %9 : i1 to i32
    %c0_i32_9 = arith.constant 0 : i32
    %11 = arith.cmpi ne, %10, %c0_i32_9 : i32
    scf.if %11 {
      %c0_10 = arith.constant 0 : index
      %c0_11 = arith.constant 0 : index
      %12 = vector.load %arg6[%c0_10, %c0_11] : memref<128x128xf32, #tpu.memory_space<vmem>>, vector<128x128xf32>
      %13 = math.tanh %12 : vector<128x128xf32>
      %c0_12 = arith.constant 0 : index
      %c0_13 = arith.constant 0 : index
      %14 = vector.load %arg5[%c0_12, %c0_13] : memref<128x128xf32, #tpu.memory_space<vmem>>, vector<128x128xf32>
      tpu.vector_store %arg5[%c0_12, %c0_13], %13 {strides = array<i32>} : memref<128x128xf32, #tpu.memory_space<vmem>>, vector<128x128xf32>,
    } else {
    }
    return
  }
  func.func @transform_0(%arg0: i32, %arg1: i32, %arg2: i32) -> (i32, i32) {
    %c0_i32 = arith.constant 0 : i32
    return %arg0, %arg2 : i32, i32
  }
  func.func @transform_1(%arg0: i32, %arg1: i32, %arg2: i32) -> (i32, i32) {
    %c0_i32 = arith.constant 0 : i32
    return %arg2, %arg1 : i32, i32
  }
  func.func @transform_2(%arg0: i32, %arg1: i32, %arg2: i32) -> (i32, i32) {
    %c0_i32 = arith.constant 0 : i32
    return %arg0, %arg1 : i32, i32
  }
}

</mosaic_0001>

<llo_original>
// kernel: tpu_custom_call.1
$region0: #{tpu_custom_call.1}
  #allocation0 [shape = 'u32[]', space=smem, size = 0x4, offset = 0x4, fixed_abs, tag = 'smem constant byte address 0x4 - core index']
  #allocation1 [shape = 'u32[144,128]{1,0:T(1,128)}', space=vmem, size = 0x12000, scoped, tag = 'internal scratch']
  #allocation2 [shape = 'f32[128,128]{1,0:T(8,128)}', space=vmem, size = 0x10000, scoped, tag = 'scratch operand']
  %s0 = inlined_call_operand.hbm [shape: f32[128,128], index: 0, kind: input, shape index: {}]
  %s1 = inlined_call_operand.hbm [shape: f32[128,128], index: 1, kind: input, shape index: {}]
  %s2 = inlined_call_operand.hbm [shape: f32[128,128], index: 2, kind: output, shape index: {}]
  %s3 = sld [smem:[#allocation0]]
  $region34: #{tpu_custom_call.1} parent=0
    _
  %s5 = ssub.s32 1, %s3
  %s6 = scalar_select 0, %s5, %s3
  $region1: #{tpu_custom_call.1} parent=0
    #allocation3 [shape = 'u8[65536]{0}', space=vmem, size = 0x10000, scoped, tag = 'input window, operand 0, single buffered']
    #allocation4 [shape = 's32[1]{0}', space=sflag, size = 0x4, scoped, tag = 'scoped memory for tpu_custom_call.1']
    #allocation5 [shape = 's32[1]{0}', space=sflag, size = 0x4, scoped, tag = 'scoped memory for tpu_custom_call.1']
    #allocation6 [shape = 'u8[65536]{0}', space=vmem, size = 0x10000, scoped, tag = 'input window, operand 1, single buffered']
    #allocation7 [shape = 's32[1]{0}', space=sflag, size = 0x4, scoped, tag = 'scoped memory for tpu_custom_call.1']
    #allocation8 [shape = 'u8[65536]{0}', space=vmem, size = 0x10000, scoped, tag = 'output window, operand 0, single buffered']
    %7 = vsyncpa [#allocation4], 0
    %8 = vsyncpa [#allocation7], 0
    %9 = vsyncpa [#allocation5], 0
    // Predicated region
    $region2: #{tpu_custom_call.1} parent=1 // pred_check
      _
    $region3: #{tpu_custom_call.1} parent=1 // pred_check_branch
      %11 = sbr.rel (0) target = $region5
    $region4: #{tpu_custom_call.1} parent=1 // pred_region
      %s13 = ssub.s32 2048, 2048
      %14 = vsyncadd [#allocation4], %s13
      %s15 = sshll.u32 [#allocation3], 4
      %s16 = int_to_ptr.vmem [resolvable:$true] %s15
      %21 = dma.hbm_to_vmem [thread:$0]  %s0, 2048, %s16, [#allocation4], 128, 128, 8
    $region5: #{tpu_custom_call.1} parent=1 // pred_fallthru
      _
    // Predicated region
    $region6: #{tpu_custom_call.1} parent=1 // pred_check
      _
    $region7: #{tpu_custom_call.1} parent=1 // pred_check_branch
      %23 = sbr.rel (0) target = $region9
    $region8: #{tpu_custom_call.1} parent=1 // pred_region
      %s25 = ssub.s32 2048, 2048
      %26 = vsyncadd [#allocation7], %s25
      %s27 = sshll.u32 [#allocation6], 4
      %s28 = int_to_ptr.vmem [resolvable:$true] %s27
      %33 = dma.hbm_to_vmem [thread:$0]  %s1, 2048, %s28, [#allocation7], 128, 128, 8
    $region9: #{tpu_custom_call.1} parent=1 // pred_fallthru
      _
    // Predicated region
    $region10: #{tpu_custom_call.1} parent=1 // pred_check
      _
    $region11: #{tpu_custom_call.1} parent=1 // pred_check_branch
      %35 = sbr.rel (0) target = $region13
    $region12: #{tpu_custom_call.1} parent=1 // pred_region
      %36 = dma.done [#allocation4], 2048
    $region13: #{tpu_custom_call.1} parent=1 // pred_fallthru
      _
    // Predicated region
    $region14: #{tpu_custom_call.1} parent=1 // pred_check
      _
    $region15: #{tpu_custom_call.1} parent=1 // pred_check_branch
      %38 = sbr.rel (0) target = $region17
    $region16: #{tpu_custom_call.1} parent=1 // pred_region
      %39 = dma.done [#allocation7], 2048
    $region17: #{tpu_custom_call.1} parent=1 // pred_fallthru
      _
    %p40 = scmp.eq.s32.totalorder 0, 0
    // Predicated region
    $region18: #{tpu_custom_call.1} parent=1 // pred_check
      %p41 = pneg %p40
    $region19: #{tpu_custom_call.1} parent=1 // pred_check_branch
      %43 = sbr.rel (%p41) target = $region21
    $region20: #{tpu_custom_call.1} parent=1 // pred_region
      %44 = vst [vmem:[#allocation2] sm:$0xff] 0.0
      %45 = vst [vmem:[#allocation2 + $0x8] sm:$0xff] 0.0
      %46 = vst [vmem:[#allocation2 + $0x10] sm:$0xff] 0.0
      %47 = vst [vmem:[#allocation2 + $0x18] sm:$0xff] 0.0
      %48 = vst [vmem:[#allocation2 + $0x20] sm:$0xff] 0.0
      %49 = vst [vmem:[#allocation2 + $0x28] sm:$0xff] 0.0
      %50 = vst [vmem:[#allocation2 + $0x30] sm:$0xff] 0.0
      %51 = vst [vmem:[#allocation2 + $0x38] sm:$0xff] 0.0
      %52 = vst [vmem:[#allocation2 + $0x40] sm:$0xff] 0.0
      %53 = vst [vmem:[#allocation2 + $0x48] sm:$0xff] 0.0
      %54 = vst [vmem:[#allocation2 + $0x50] sm:$0xff] 0.0
      %55 = vst [vmem:[#allocation2 + $0x58] sm:$0xff] 0.0
      %56 = vst [vmem:[#allocation2 + $0x60] sm:$0xff] 0.0
      %57 = vst [vmem:[#allocation2 + $0x68] sm:$0xff] 0.0
      %58 = vst [vmem:[#allocation2 + $0x70] sm:$0xff] 0.0
      %59 = vst [vmem:[#allocation2 + $0x78] sm:$0xff] 0.0
    $region21: #{tpu_custom_call.1} parent=1 // pred_fallthru
      _
    %v60 = vld [vmem:[#allocation2] sm:$0xff]
    %v61 = vld [vmem:[#allocation2 + $0x8] sm:$0xff]
    %v62 = vld [vmem:[#allocation2 + $0x10] sm:$0xff]
    %v63 = vld [vmem:[#allocation2 + $0x18] sm:$0xff]
    %v64 = vld [vmem:[#allocation2 + $0x20] sm:$0xff]
    %v65 = vld [vmem:[#allocation2 + $0x28] sm:$0xff]
    %v66 = vld [vmem:[#allocation2 + $0x30] sm:$0xff]
    %v67 = vld [vmem:[#allocation2 + $0x38] sm:$0xff]
    %v68 = vld [vmem:[#allocation2 + $0x40] sm:$0xff]
    %v69 = vld [vmem:[#allocation2 + $0x48] sm:$0xff]
    %v70 = vld [vmem:[#allocation2 + $0x50] sm:$0xff]
    %v71 = vld [vmem:[#allocation2 + $0x58] sm:$0xff]
    %v72 = vld [vmem:[#allocation2 + $0x60] sm:$0xff]
    %v73 = vld [vmem:[#allocation2 + $0x68] sm:$0xff]
    %v74 = vld [vmem:[#allocation2 + $0x70] sm:$0xff]
    %v75 = vld [vmem:[#allocation2 + $0x78] sm:$0xff]
    %v76 = vld [vmem:[#allocation3] sm:$0xff]
    %v77 = vld [vmem:[#allocation3 + $0x8] sm:$0xff]
    %v78 = vld [vmem:[#allocation3 + $0x10] sm:$0xff]
    %v79 = vld [vmem:[#allocation3 + $0x18] sm:$0xff]
    %v80 = vld [vmem:[#allocation3 + $0x20] sm:$0xff]
    %v81 = vld [vmem:[#allocation3 + $0x28] sm:$0xff]
    %v82 = vld [vmem:[#allocation3 + $0x30] sm:$0xff]
    %v83 = vld [vmem:[#allocation3 + $0x38] sm:$0xff]
    %v84 = vld [vmem:[#allocation3 + $0x40] sm:$0xff]
    %v85 = vld [vmem:[#allocation3 + $0x48] sm:$0xff]
    %v86 = vld [vmem:[#allocation3 + $0x50] sm:$0xff]
    %v87 = vld [vmem:[#allocation3 + $0x58] sm:$0xff]
    %v88 = vld [vmem:[#allocation3 + $0x60] sm:$0xff]
    %v89 = vld [vmem:[#allocation3 + $0x68] sm:$0xff]
    %v90 = vld [vmem:[#allocation3 + $0x70] sm:$0xff]
    %v91 = vld [vmem:[#allocation3 + $0x78] sm:$0xff]
    %v92 = vld [vmem:[#allocation6] sm:$0xff]
    %v93 = vld [vmem:[#allocation6 + $0x8] sm:$0xff]
    %v94 = vld [vmem:[#allocation6 + $0x10] sm:$0xff]
    %v95 = vld [vmem:[#allocation6 + $0x18] sm:$0xff]
    %v96 = vld [vmem:[#allocation6 + $0x20] sm:$0xff]
    %v97 = vld [vmem:[#allocation6 + $0x28] sm:$0xff]
    %v98 = vld [vmem:[#allocation6 + $0x30] sm:$0xff]
    %v99 = vld [vmem:[#allocation6 + $0x38] sm:$0xff]
    %v100 = vld [vmem:[#allocation6 + $0x40] sm:$0xff]
    %v101 = vld [vmem:[#allocation6 + $0x48] sm:$0xff]
    %v102 = vld [vmem:[#allocation6 + $0x50] sm:$0xff]
    %v103 = vld [vmem:[#allocation6 + $0x58] sm:$0xff]
    %v104 = vld [vmem:[#allocation6 + $0x60] sm:$0xff]
    %v105 = vld [vmem:[#allocation6 + $0x68] sm:$0xff]
    %v106 = vld [vmem:[#allocation6 + $0x70] sm:$0xff]
    %v107 = vld [vmem:[#allocation6 + $0x78] sm:$0xff]
    %108 = vmatprep.subr.mxu0 0.0
    %109 = vmatpush1.msra.mxu0 %v107
    %110 = vmatprep.subr.mxu0 0.0
    %111 = vmatpush1.msra.mxu0 %v106
    %112 = vmatprep.subr.mxu0 0.0
    %113 = vmatpush1.msra.mxu0 %v105
    %114 = vmatprep.subr.mxu0 0.0
    %115 = vmatpush1.msra.mxu0 %v104
    %116 = vmatprep.subr.mxu0 0.0
    %117 = vmatpush1.msra.mxu0 %v103
    %118 = vmatprep.subr.mxu0 0.0
    %119 = vmatpush1.msra.mxu0 %v102
    %120 = vmatprep.subr.mxu0 0.0
    %121 = vmatpush1.msra.mxu0 %v101
    %122 = vmatprep.subr.mxu0 0.0
    %123 = vmatpush1.msra.mxu0 %v100
    %124 = vmatprep.subr.mxu0 0.0
    %125 = vmatpush1.msra.mxu0 %v99
    %126 = vmatprep.subr.mxu0 0.0
    %127 = vmatpush1.msra.mxu0 %v98
    %128 = vmatprep.subr.mxu0 0.0
    %129 = vmatpush1.msra.mxu0 %v97
    %130 = vmatprep.subr.mxu0 0.0
    %131 = vmatpush1.msra.mxu0 %v96
    %132 = vmatprep.subr.mxu0 0.0
    %133 = vmatpush1.msra.mxu0 %v95
    %134 = vmatprep.subr.mxu0 0.0
    %135 = vmatpush1.msra.mxu0 %v94
    %136 = vmatprep.subr.mxu0 0.0
    %137 = vmatpush1.msra.mxu0 %v93
    %138 = vmatprep.subr.mxu0 0.0
    %139 = vmatpush1.msra.mxu0 %v92
    %140 = vmatprep.subr.mxu0 0.0
    %141 = vmatpush2.msra.mxu0 0.0
    %142 = vmatprep.subr.mxu0 0.0
    %143 = vmatpush2.msra.mxu0 0.0
    %144 = vmatprep.subr.mxu0 0.0
    %145 = vmatpush2.msra.mxu0 0.0
    %146 = vmatprep.subr.mxu0 0.0
    %147 = vmatpush2.msra.mxu0 0.0
    %148 = vmatprep.subr.mxu0 0.0
    %149 = vmatpush2.msra.mxu0 0.0
    %150 = vmatprep.subr.mxu0 0.0
    %151 = vmatpush2.msra.mxu0 0.0
    %152 = vmatprep.subr.mxu0 0.0
    %153 = vmatpush2.msra.mxu0 0.0
    %154 = vmatprep.subr.mxu0 0.0
    %155 = vmatpush2.msra.mxu0 0.0
    %156 = vmatprep.subr.mxu0 0.0
    %157 = vmatpush2.msra.mxu0 0.0
    %158 = vmatprep.subr.mxu0 0.0
    %159 = vmatpush2.msra.mxu0 0.0
    %160 = vmatprep.subr.mxu0 0.0
    %161 = vmatpush2.msra.mxu0 0.0
    %162 = vmatprep.subr.mxu0 0.0
    %163 = vmatpush2.msra.mxu0 0.0
    %164 = vmatprep.subr.mxu0 0.0
    %165 = vmatpush2.msra.mxu0 0.0
    %166 = vmatprep.subr.mxu0 0.0
    %167 = vmatpush2.msra.mxu0 0.0
    %168 = vmatprep.subr.mxu0 0.0
    %169 = vmatpush2.msra.mxu0 0.0
    %170 = vmatprep.subr.mxu0 0.0
    %171 = vmatpush2.msra.mxu0 0.0
    %172 = vmatprep.mubr.f32.mxu0 0.0
    %173 = vmatmul.mubr.f32.gmra.mxu0 %v76
    %v174 = vpop.f32.mrf.mxu0
    %v175 = vadd.f32 0.0, %v174
    %v176 = vpop.f32.mrf.mxu0
    %177 = vmatprep.mubr.f32.mxu0 0.0
    %178 = vmatmul.mubr.f32.gmra.mxu0 %v77
    %v179 = vpop.f32.mrf.mxu0
    %v180 = vadd.f32 0.0, %v179
    %v181 = vpop.f32.mrf.mxu0
    %182 = vmatprep.mubr.f32.mxu0 0.0
    %183 = vmatmul.mubr.f32.gmra.mxu0 %v78
    %v184 = vpop.f32.mrf.mxu0
    %v185 = vadd.f32 0.0, %v184
    %v186 = vpop.f32.mrf.mxu0
    %187 = vmatprep.mubr.f32.mxu0 0.0
    %188 = vmatmul.mubr.f32.gmra.mxu0 %v79
    %v189 = vpop.f32.mrf.mxu0
    %v190 = vadd.f32 0.0, %v189
    %v191 = vpop.f32.mrf.mxu0
    %192 = vmatprep.mubr.f32.mxu0 0.0
    %193 = vmatmul.mubr.f32.gmra.mxu0 %v80
    %v194 = vpop.f32.mrf.mxu0
    %v195 = vadd.f32 0.0, %v194
    %v196 = vpop.f32.mrf.mxu0
    %197 = vmatprep.mubr.f32.mxu0 0.0
    %198 = vmatmul.mubr.f32.gmra.mxu0 %v81
    %v199 = vpop.f32.mrf.mxu0
    %v200 = vadd.f32 0.0, %v199
    %v201 = vpop.f32.mrf.mxu0
    %202 = vmatprep.mubr.f32.mxu0 0.0
    %203 = vmatmul.mubr.f32.gmra.mxu0 %v82
    %v204 = vpop.f32.mrf.mxu0
    %v205 = vadd.f32 0.0, %v204
    %v206 = vpop.f32.mrf.mxu0
    %207 = vmatprep.mubr.f32.mxu0 0.0
    %208 = vmatmul.mubr.f32.gmra.mxu0 %v83
    %v209 = vpop.f32.mrf.mxu0
    %v210 = vadd.f32 0.0, %v209
    %v211 = vpop.f32.mrf.mxu0
    %212 = vmatprep.mubr.f32.mxu0 0.0
    %213 = vmatmul.mubr.f32.gmra.mxu0 %v84
    %v214 = vpop.f32.mrf.mxu0
    %v215 = vadd.f32 0.0, %v214
    %v216 = vpop.f32.mrf.mxu0
    %217 = vmatprep.mubr.f32.mxu0 0.0
    %218 = vmatmul.mubr.f32.gmra.mxu0 %v85
    %v219 = vpop.f32.mrf.mxu0
    %v220 = vadd.f32 0.0, %v219
    %v221 = vpop.f32.mrf.mxu0
    %222 = vmatprep.mubr.f32.mxu0 0.0
    %223 = vmatmul.mubr.f32.gmra.mxu0 %v86
    %v224 = vpop.f32.mrf.mxu0
    %v225 = vadd.f32 0.0, %v224
    %v226 = vpop.f32.mrf.mxu0
    %227 = vmatprep.mubr.f32.mxu0 0.0
    %228 = vmatmul.mubr.f32.gmra.mxu0 %v87
    %v229 = vpop.f32.mrf.mxu0
    %v230 = vadd.f32 0.0, %v229
    %v231 = vpop.f32.mrf.mxu0
    %232 = vmatprep.mubr.f32.mxu0 0.0
    %233 = vmatmul.mubr.f32.gmra.mxu0 %v88
    %v234 = vpop.f32.mrf.mxu0
    %v235 = vadd.f32 0.0, %v234
    %v236 = vpop.f32.mrf.mxu0
    %237 = vmatprep.mubr.f32.mxu0 0.0
    %238 = vmatmul.mubr.f32.gmra.mxu0 %v89
    %v239 = vpop.f32.mrf.mxu0
    %v240 = vadd.f32 0.0, %v239
    %v241 = vpop.f32.mrf.mxu0
    %242 = vmatprep.mubr.f32.mxu0 0.0
    %243 = vmatmul.mubr.f32.gmra.mxu0 %v90
    %v244 = vpop.f32.mrf.mxu0
    %v245 = vadd.f32 0.0, %v244
    %v246 = vpop.f32.mrf.mxu0
    %247 = vmatprep.mubr.f32.mxu0 0.0
    %248 = vmatmul.mubr.f32.gmra.mxu0 %v91
    %v249 = vpop.f32.mrf.mxu0
    %v250 = vadd.f32 0.0, %v249
    %v251 = vpop.f32.mrf.mxu0
    %252 = vdwg.mxu0
    %v253 = vadd.f32 %v60, %v175
    %v254 = vadd.f32 %v61, %v180
    %v255 = vadd.f32 %v62, %v185
    %v256 = vadd.f32 %v63, %v190
    %v257 = vadd.f32 %v64, %v195
    %v258 = vadd.f32 %v65, %v200
    %v259 = vadd.f32 %v66, %v205
    %v260 = vadd.f32 %v67, %v210
    %v261 = vadd.f32 %v68, %v215
    %v262 = vadd.f32 %v69, %v220
    %v263 = vadd.f32 %v70, %v225
    %v264 = vadd.f32 %v71, %v230
    %v265 = vadd.f32 %v72, %v235
    %v266 = vadd.f32 %v73, %v240
    %v267 = vadd.f32 %v74, %v245
    %v268 = vadd.f32 %v75, %v250
    %269 = vst [vmem:[#allocation2] sm:$0xff] %v253
    %270 = vst [vmem:[#allocation2 + $0x8] sm:$0xff] %v254
    %271 = vst [vmem:[#allocation2 + $0x10] sm:$0xff] %v255
    %272 = vst [vmem:[#allocation2 + $0x18] sm:$0xff] %v256
    %273 = vst [vmem:[#allocation2 + $0x20] sm:$0xff] %v257
    %274 = vst [vmem:[#allocation2 + $0x28] sm:$0xff] %v258
    %275 = vst [vmem:[#allocation2 + $0x30] sm:$0xff] %v259
    %276 = vst [vmem:[#allocation2 + $0x38] sm:$0xff] %v260
    %277 = vst [vmem:[#allocation2 + $0x40] sm:$0xff] %v261
    %278 = vst [vmem:[#allocation2 + $0x48] sm:$0xff] %v262
    %279 = vst [vmem:[#allocation2 + $0x50] sm:$0xff] %v263
    %280 = vst [vmem:[#allocation2 + $0x58] sm:$0xff] %v264
    %281 = vst [vmem:[#allocation2 + $0x60] sm:$0xff] %v265
    %282 = vst [vmem:[#allocation2 + $0x68] sm:$0xff] %v266
    %283 = vst [vmem:[#allocation2 + $0x70] sm:$0xff] %v267
    %284 = vst [vmem:[#allocation2 + $0x78] sm:$0xff] %v268
    // Predicated region
    $region22: #{tpu_custom_call.1} parent=1 // pred_check
      %p285 = pneg %p40
    $region23: #{tpu_custom_call.1} parent=1 // pred_check_branch
      %287 = sbr.rel (%p285) target = $region25
    $region24: #{tpu_custom_call.1} parent=1 // pred_region
      %v288 = vld [vmem:[#allocation2] sm:$0xff]
      %v289 = vld [vmem:[#allocation2 + $0x8] sm:$0xff]
      %v290 = vld [vmem:[#allocation2 + $0x10] sm:$0xff]
      %v291 = vld [vmem:[#allocation2 + $0x18] sm:$0xff]
      %v292 = vld [vmem:[#allocation2 + $0x20] sm:$0xff]
      %v293 = vld [vmem:[#allocation2 + $0x28] sm:$0xff]
      %v294 = vld [vmem:[#allocation2 + $0x30] sm:$0xff]
      %v295 = vld [vmem:[#allocation2 + $0x38] sm:$0xff]
      %v296 = vld [vmem:[#allocation2 + $0x40] sm:$0xff]
      %v297 = vld [vmem:[#allocation2 + $0x48] sm:$0xff]
      %v298 = vld [vmem:[#allocation2 + $0x50] sm:$0xff]
      %v299 = vld [vmem:[#allocation2 + $0x58] sm:$0xff]
      %v300 = vld [vmem:[#allocation2 + $0x60] sm:$0xff]
      %v301 = vld [vmem:[#allocation2 + $0x68] sm:$0xff]
      %v302 = vld [vmem:[#allocation2 + $0x70] sm:$0xff]
      %v303 = vld [vmem:[#allocation2 + $0x78] sm:$0xff]
      %v304 = vtanh.pop %v288
      %v305 = vtanh.pop %v289
      %v306 = vtanh.pop %v290
      %v307 = vtanh.pop %v291
      %v308 = vtanh.pop %v292
      %v309 = vtanh.pop %v293
      %v310 = vtanh.pop %v294
      %v311 = vtanh.pop %v295
      %v312 = vtanh.pop %v296
      %v313 = vtanh.pop %v297
      %v314 = vtanh.pop %v298
      %v315 = vtanh.pop %v299
      %v316 = vtanh.pop %v300
      %v317 = vtanh.pop %v301
      %v318 = vtanh.pop %v302
      %v319 = vtanh.pop %v303
      %320 = vst [vmem:[#allocation8] sm:$0xff] %v304
      %321 = vst [vmem:[#allocation8 + $0x8] sm:$0xff] %v305
      %322 = vst [vmem:[#allocation8 + $0x10] sm:$0xff] %v306
      %323 = vst [vmem:[#allocation8 + $0x18] sm:$0xff] %v307
      %324 = vst [vmem:[#allocation8 + $0x20] sm:$0xff] %v308
      %325 = vst [vmem:[#allocation8 + $0x28] sm:$0xff] %v309
      %326 = vst [vmem:[#allocation8 + $0x30] sm:$0xff] %v310
      %327 = vst [vmem:[#allocation8 + $0x38] sm:$0xff] %v311
      %328 = vst [vmem:[#allocation8 + $0x40] sm:$0xff] %v312
      %329 = vst [vmem:[#allocation8 + $0x48] sm:$0xff] %v313
      %330 = vst [vmem:[#allocation8 + $0x50] sm:$0xff] %v314
      %331 = vst [vmem:[#allocation8 + $0x58] sm:$0xff] %v315
      %332 = vst [vmem:[#allocation8 + $0x60] sm:$0xff] %v316
      %333 = vst [vmem:[#allocation8 + $0x68] sm:$0xff] %v317
      %334 = vst [vmem:[#allocation8 + $0x70] sm:$0xff] %v318
      %335 = vst [vmem:[#allocation8 + $0x78] sm:$0xff] %v319
    $region25: #{tpu_custom_call.1} parent=1 // pred_fallthru
      _
    // Predicated region
    $region26: #{tpu_custom_call.1} parent=1 // pred_check
      _
    $region27: #{tpu_custom_call.1} parent=1 // pred_check_branch
      %337 = sbr.rel (0) target = $region29
    $region28: #{tpu_custom_call.1} parent=1 // pred_region
      %s339 = ssub.s32 2048, 2048
      %340 = vsyncadd [#allocation5], %s339
      %s341 = sshll.u32 [#allocation8], 4
      %s342 = int_to_ptr.vmem [resolvable:$true] %s341
      %347 = dma.vmem_to_hbm [thread:$0]  %s342, 2048, %s2, [#allocation5], 128, 128, 8
    $region29: #{tpu_custom_call.1} parent=1 // pred_fallthru
      _
    // Predicated region
    $region30: #{tpu_custom_call.1} parent=1 // pred_check
      _
    $region31: #{tpu_custom_call.1} parent=1 // pred_check_branch
      %349 = sbr.rel (0) target = $region33
    $region32: #{tpu_custom_call.1} parent=1 // pred_region
      %350 = dma.done [#allocation5], 2048
    $region33: #{tpu_custom_call.1} parent=1 // pred_fallthru
      _
    %351 = vsyncpa [#allocation4], 1
    %352 = vsyncpa [#allocation7], 1
    %353 = vsyncpa [#allocation5], 1

</llo_original>
